<compile_context>
chip_gen: v7x
topology: tpu7x:2x2x1
jax: 0.10.0
libtpu: 0.0.40
codegen_flags: <defaults>
</compile_context>

<pallas_src>
import jax
import jax.numpy as jnp
from jax.experimental import pallas as pl
from jax.experimental.pallas import tpu as pltpu


def decoder_kernel(y_ref, hc0_ref, vec_ref, mat_ref, out_ref):
    """Single grid point; whole problem (~10 KiB) resident in VMEM.

    y_ref   : (B, T)    f32  shifted target (one scalar LSTM input per step)
    hc0_ref : (2B, H)   f32  rows [0:B) = h_0, rows [B:2B) = c_0
    vec_ref : (3, 4H)   f32  row 0 = w_ih^T (g cols x2), row 1 = b_ih + b_hh
                             (g cols x2), row 2 = fc bias (zero-padded)
    mat_ref : (2H, 4H)  f32  rows [0:H) = w_hh^T (g cols x2),
                             rows [H:2H) = fc weight^T (zero-padded)
    out_ref : (B, 4H)   f32  fc output in columns [0, O), zeros elsewhere
    """
    B2, H = hc0_ref.shape
    B = B2 // 2
    T = y_ref.shape[1]

    w_ih = vec_ref[0:1, :]        # (1, 4H)
    bias = vec_ref[1:2, :]        # (1, 4H)
    b_fc = vec_ref[2:3, :]        # (1, 4H)
    w_hh = mat_ref[0:H, :]        # (H, 4H)
    w_fc = mat_ref[H:, :]         # (H, 4H)

    y = y_ref[...]                # (B, T)

    # Input terms for all T steps: independent of h/c, so they sit off the
    # serial recurrence and the scheduler overlaps them with the loop.
    inp = [y[:, t:t + 1] * w_ih + bias for t in range(T)]   # T x (B, 4H)

    h = hc0_ref[0:B, :]           # (B, H)
    c = hc0_ref[B:, :]            # (B, H)

    # TODO(synk): w_hh could be kept resident in MXU weight registers across
    # the 8 dependent matmuls via pltpu.matmul_push_rhs/_acc_lhs/_pop (or the
    # tiny K=32 dot moved to a VPU multiply/add tree on v6e/v7x); left to the
    # compiler here for portability / compile robustness.
    for t in range(T):            # T is a trace-time constant: fully unrolled
        gates = inp[t] + jnp.dot(h, w_hh,
                                 preferred_element_type=jnp.float32)  # (B, 4H)
        # One full-width sigmoid; the g gate is recovered via
        # tanh(x) = 2*sigmoid(2x) - 1 (the x2 is pre-folded into the g
        # columns of w_ih / w_hh / bias at prep time).
        sig = jax.nn.sigmoid(gates)                  # EUP pass 1 (full width)
        i = sig[:, 0 * H:1 * H]
        f = sig[:, 1 * H:2 * H]
        g = 2.0 * sig[:, 2 * H:3 * H] - 1.0
        o = sig[:, 3 * H:4 * H]
        c = f * c + i * g
        h = o * jnp.tanh(c)                          # EUP pass 2 (H wide)

    # fc on the final hidden state; lane-dense (B, 4H) store, sliced outside.
    out_ref[...] = jnp.dot(h, w_fc, preferred_element_type=jnp.float32) + b_fc


def prepare_kernel_params(params):
    """One-time prep (NOT on the per-call path): fold the tanh->sigmoid x2
    scale into the g-gate columns, zero-pad fc to the lane-dense 4H width, and
    pack the operands into two slabs so the kernel sees 4 input DMAs total."""
    H = params["w_hh"].shape[0]
    O = params["w_fc"].shape[1]
    W = 4 * H
    assert W % 128 == 0 and O <= W, (H, O)

    scale = jnp.ones((1, W), jnp.float32).at[:, 2 * H:3 * H].set(2.0)
    w_ih_s = params["w_ih"] * scale
    b_s = params["b"] * scale
    w_hh_s = params["w_hh"] * scale
    b_fc_p = jnp.zeros((1, W), jnp.float32).at[:, :O].set(params["b_fc"])
    w_fc_p = jnp.zeros((H, W), jnp.float32).at[:, :O].set(params["w_fc"])

    vec = jnp.concatenate([w_ih_s, b_s, b_fc_p], axis=0)     # (3, 4H)
    mat = jnp.concatenate([w_hh_s, w_fc_p], axis=0)          # (2H, 4H)
    return {"vec": vec, "mat": mat, "output_size": O, "hidden_size": H}


def decoder_forward(y_hist, hc0, kparams):
    """Hot path: a single pallas_call (no per-call padding/casting/transposes)."""
    B = y_hist.shape[0]
    W = kparams["vec"].shape[1]                # 4H, lane-dense slab width
    O = kparams["output_size"]

    vmem = pl.BlockSpec(memory_space=pltpu.MemorySpace.VMEM)
    out = pl.pallas_call(
        decoder_kernel,
        out_shape=jax.ShapeDtypeStruct((B, W), jnp.float32),
        in_specs=[vmem, vmem, vmem, vmem],
        out_specs=vmem,
    )(y_hist, hc0, kparams["vec"], kparams["mat"])
    return out[:, :O]


def decoder_ref(y_hist, params, h0, c0):
    """Pure-JAX f32 reference of the same forward (correctness check)."""
    B, T = y_hist.shape
    H = params["w_hh"].shape[0]
    h, c = h0, c0
    for t in range(T):
        x = y_hist[:, t:t + 1]
        gates = x * params["w_ih"] + h @ params["w_hh"] + params["b"]
        i = jax.nn.sigmoid(gates[:, 0 * H:1 * H])
        f = jax.nn.sigmoid(gates[:, 1 * H:2 * H])
        g = jnp.tanh(gates[:, 2 * H:3 * H])
        o = jax.nn.sigmoid(gates[:, 3 * H:4 * H])
        c = f * c + i * g
        h = o * jnp.tanh(c)
    return h @ params["w_fc"] + params["b_fc"]


def init_params(key, hidden_size, output_size):
    """Deterministic synthetic parameters (shapes match the nn.Module)."""
    H, O = hidden_size, output_size
    ks = jax.random.split(key, 6)
    s_lstm = 1.0 / jnp.sqrt(H)       # PyTorch LSTM default uniform bound
    s_fc = 1.0 / jnp.sqrt(H)         # PyTorch Linear default uniform bound
    w_ih = jax.random.uniform(ks[0], (1, 4 * H), jnp.float32, -s_lstm, s_lstm)
    w_hh = jax.random.uniform(ks[1], (H, 4 * H), jnp.float32, -s_lstm, s_lstm)
    b_ih = jax.random.uniform(ks[2], (1, 4 * H), jnp.float32, -s_lstm, s_lstm)
    b_hh = jax.random.uniform(ks[3], (1, 4 * H), jnp.float32, -s_lstm, s_lstm)
    w_fc = jax.random.uniform(ks[4], (H, O), jnp.float32, -s_fc, s_fc)
    b_fc = jax.random.uniform(ks[5], (1, O), jnp.float32, -s_fc, s_fc)
    return {"w_ih": w_ih, "w_hh": w_hh, "b": b_ih + b_hh,
            "w_fc": w_fc, "b_fc": b_fc}


if __name__ == "__main__":
    B, T, H, O = 2, 8, 32, 4   # batch, seq_len, hidden_size_decoder, output_size

    key = jax.random.PRNGKey(0)
    k_y, k_p, k_h, k_c = jax.random.split(key, 4)

    y_hist = jax.random.normal(k_y, (B, T), jnp.float32)
    params = init_params(k_p, H, O)
    kparams = prepare_kernel_params(params)       # one-time prep, off hot path

    # init_hidden(..., xavier=True): xavier-normal tensor of shape (1, B, H),
    # fan_in = B*H, fan_out = 1*H  ->  std = sqrt(2 / ((B + 1) * H))
    xavier_std = jnp.sqrt(2.0 / ((B + 1) * H)).astype(jnp.float32)
    h0 = xavier_std * jax.random.normal(k_h, (B, H), jnp.float32)
    c0 = xavier_std * jax.random.normal(k_c, (B, H), jnp.float32)
    hc0 = jnp.concatenate([h0, c0], axis=0)       # packed once at data prep

    out = jax.block_until_ready(decoder_forward(y_hist, hc0, kparams))
    ref = decoder_ref(y_hist, params, h0, c0)

    assert out.shape == (B, O), out.shape
    # All-f32 kernel (f32 MXU accumulation): tight tolerance vs the f32 ref,
    # margin only for EUP transcendental approximation differences.
    assert jnp.allclose(out, ref, atol=2e-4, rtol=2e-4), (out, ref)
    print("KERNEL_OK")
</pallas_src>

<mosaic_0001>
module attributes {stable_mosaic.version = 11 : i64} {
  func.func @decoder_kernel(%arg0: memref<2x8xf32, #tpu.memory_space<vmem>>, %arg1: memref<4x32xf32, #tpu.memory_space<vmem>>, %arg2: memref<3x128xf32, #tpu.memory_space<vmem>>, %arg3: memref<64x128xf32, #tpu.memory_space<vmem>>, %arg4: memref<2x128xf32, #tpu.memory_space<vmem>>) attributes {dimension_semantics = [], scalar_prefetch = 0 : i64, scratch_operands = 0 : i64, tpu.core_type = #tpu.core_type<tc>} {
    %c0 = arith.constant 0 : index
    %c0_0 = arith.constant 0 : index
    %0 = vector.load %arg2[%c0, %c0_0] : memref<3x128xf32, #tpu.memory_space<vmem>>, vector<1x128xf32>
    %c1 = arith.constant 1 : index
    %c0_1 = arith.constant 0 : index
    %1 = vector.load %arg2[%c1, %c0_1] : memref<3x128xf32, #tpu.memory_space<vmem>>, vector<1x128xf32>
    %c2 = arith.constant 2 : index
    %c0_2 = arith.constant 0 : index
    %2 = vector.load %arg2[%c2, %c0_2] : memref<3x128xf32, #tpu.memory_space<vmem>>, vector<1x128xf32>
    %c0_3 = arith.constant 0 : index
    %c0_4 = arith.constant 0 : index
    %3 = vector.load %arg3[%c0_3, %c0_4] : memref<64x128xf32, #tpu.memory_space<vmem>>, vector<32x128xf32>
    %c32 = arith.constant 32 : index
    %c0_5 = arith.constant 0 : index
    %4 = vector.load %arg3[%c32, %c0_5] : memref<64x128xf32, #tpu.memory_space<vmem>>, vector<32x128xf32>
    %c0_6 = arith.constant 0 : index
    %c0_7 = arith.constant 0 : index
    %5 = vector.load %arg0[%c0_6, %c0_7] : memref<2x8xf32, #tpu.memory_space<vmem>>, vector<2x8xf32>
    %6 = vector.extract_strided_slice %5 {offsets = [0, 0], sizes = [2, 1], strides = [1, 1]} : vector<2x8xf32> to vector<2x1xf32>
    %7 = vector.broadcast %6 : vector<2x1xf32> to vector<2x128xf32>
    %8 = vector.broadcast %0 : vector<1x128xf32> to vector<2x128xf32>
    %9 = arith.mulf %7, %8 : vector<2x128xf32>
    %10 = vector.broadcast %1 : vector<1x128xf32> to vector<2x128xf32>
    %11 = arith.addf %9, %10 : vector<2x128xf32>
    %12 = vector.extract_strided_slice %5 {offsets = [0, 1], sizes = [2, 1], strides = [1, 1]} : vector<2x8xf32> to vector<2x1xf32>
    %13 = vector.broadcast %12 : vector<2x1xf32> to vector<2x128xf32>
    %14 = vector.broadcast %0 : vector<1x128xf32> to vector<2x128xf32>
    %15 = arith.mulf %13, %14 : vector<2x128xf32>
    %16 = vector.broadcast %1 : vector<1x128xf32> to vector<2x128xf32>
    %17 = arith.addf %15, %16 : vector<2x128xf32>
    %18 = vector.extract_strided_slice %5 {offsets = [0, 2], sizes = [2, 1], strides = [1, 1]} : vector<2x8xf32> to vector<2x1xf32>
    %19 = vector.broadcast %18 : vector<2x1xf32> to vector<2x128xf32>
    %20 = vector.broadcast %0 : vector<1x128xf32> to vector<2x128xf32>
    %21 = arith.mulf %19, %20 : vector<2x128xf32>
    %22 = vector.broadcast %1 : vector<1x128xf32> to vector<2x128xf32>
    %23 = arith.addf %21, %22 : vector<2x128xf32>
    %24 = vector.extract_strided_slice %5 {offsets = [0, 3], sizes = [2, 1], strides = [1, 1]} : vector<2x8xf32> to vector<2x1xf32>
    %25 = vector.broadcast %24 : vector<2x1xf32> to vector<2x128xf32>
    %26 = vector.broadcast %0 : vector<1x128xf32> to vector<2x128xf32>
    %27 = arith.mulf %25, %26 : vector<2x128xf32>
    %28 = vector.broadcast %1 : vector<1x128xf32> to vector<2x128xf32>
    %29 = arith.addf %27, %28 : vector<2x128xf32>
    %30 = vector.extract_strided_slice %5 {offsets = [0, 4], sizes = [2, 1], strides = [1, 1]} : vector<2x8xf32> to vector<2x1xf32>
    %31 = vector.broadcast %30 : vector<2x1xf32> to vector<2x128xf32>
    %32 = vector.broadcast %0 : vector<1x128xf32> to vector<2x128xf32>
    %33 = arith.mulf %31, %32 : vector<2x128xf32>
    %34 = vector.broadcast %1 : vector<1x128xf32> to vector<2x128xf32>
    %35 = arith.addf %33, %34 : vector<2x128xf32>
    %36 = vector.extract_strided_slice %5 {offsets = [0, 5], sizes = [2, 1], strides = [1, 1]} : vector<2x8xf32> to vector<2x1xf32>
    %37 = vector.broadcast %36 : vector<2x1xf32> to vector<2x128xf32>
    %38 = vector.broadcast %0 : vector<1x128xf32> to vector<2x128xf32>
    %39 = arith.mulf %37, %38 : vector<2x128xf32>
    %40 = vector.broadcast %1 : vector<1x128xf32> to vector<2x128xf32>
    %41 = arith.addf %39, %40 : vector<2x128xf32>
    %42 = vector.extract_strided_slice %5 {offsets = [0, 6], sizes = [2, 1], strides = [1, 1]} : vector<2x8xf32> to vector<2x1xf32>
    %43 = vector.broadcast %42 : vector<2x1xf32> to vector<2x128xf32>
    %44 = vector.broadcast %0 : vector<1x128xf32> to vector<2x128xf32>
    %45 = arith.mulf %43, %44 : vector<2x128xf32>
    %46 = vector.broadcast %1 : vector<1x128xf32> to vector<2x128xf32>
    %47 = arith.addf %45, %46 : vector<2x128xf32>
    %48 = vector.extract_strided_slice %5 {offsets = [0, 7], sizes = [2, 1], strides = [1, 1]} : vector<2x8xf32> to vector<2x1xf32>
    %49 = vector.broadcast %48 : vector<2x1xf32> to vector<2x128xf32>
    %50 = vector.broadcast %0 : vector<1x128xf32> to vector<2x128xf32>
    %51 = arith.mulf %49, %50 : vector<2x128xf32>
    %52 = vector.broadcast %1 : vector<1x128xf32> to vector<2x128xf32>
    %53 = arith.addf %51, %52 : vector<2x128xf32>
    %c0_8 = arith.constant 0 : index
    %c0_9 = arith.constant 0 : index
    %54 = vector.load %arg1[%c0_8, %c0_9] : memref<4x32xf32, #tpu.memory_space<vmem>>, vector<2x32xf32>
    %c2_10 = arith.constant 2 : index
    %c0_11 = arith.constant 0 : index
    %55 = vector.load %arg1[%c2_10, %c0_11] : memref<4x32xf32, #tpu.memory_space<vmem>>, vector<2x32xf32>
    %cst = arith.constant dense<0.000000e+00> : vector<2x128xf32>
    %56 = tpu.matmul %54, %3, %cst {dimension_numbers = #tpu.dot_dimension_numbers<[1], [0], [0], [1], [0, 0, 1, 1], [], []>} : vector<2x32xf32>, vector<32x128xf32>, vector<2x128xf32> -> vector<2x128xf32>
    %57 = arith.addf %11, %56 : vector<2x128xf32>
    %58 = arith.negf %57 : vector<2x128xf32>
    %59 = math.exp %58 : vector<2x128xf32>
    %cst_12 = arith.constant 1.000000e+00 : f32
    %60 = vector.broadcast %cst_12 : f32 to vector<2x128xf32>
    %61 = arith.addf %60, %59 : vector<2x128xf32>
    %62 = arith.divf %60, %61 : vector<2x128xf32>
    %63 = vector.extract_strided_slice %62 {offsets = [0, 0], sizes = [2, 32], strides = [1, 1]} : vector<2x128xf32> to vector<2x32xf32>
    %64 = vector.extract_strided_slice %62 {offsets = [0, 32], sizes = [2, 32], strides = [1, 1]} : vector<2x128xf32> to vector<2x32xf32>
    %65 = vector.extract_strided_slice %62 {offsets = [0, 64], sizes = [2, 32], strides = [1, 1]} : vector<2x128xf32> to vector<2x32xf32>
    %cst_13 = arith.constant 2.000000e+00 : f32
    %66 = vector.broadcast %cst_13 : f32 to vector<2x32xf32>
    %67 = arith.mulf %66, %65 : vector<2x32xf32>
    %cst_14 = arith.constant 1.000000e+00 : f32
    %68 = vector.broadcast %cst_14 : f32 to vector<2x32xf32>
    %69 = arith.subf %67, %68 : vector<2x32xf32>
    %70 = vector.extract_strided_slice %62 {offsets = [0, 96], sizes = [2, 32], strides = [1, 1]} : vector<2x128xf32> to vector<2x32xf32>
    %71 = arith.mulf %64, %55 : vector<2x32xf32>
    %72 = arith.mulf %63, %69 : vector<2x32xf32>
    %73 = arith.addf %71, %72 : vector<2x32xf32>
    %74 = math.tanh %73 : vector<2x32xf32>
    %75 = arith.mulf %70, %74 : vector<2x32xf32>
    %cst_15 = arith.constant dense<0.000000e+00> : vector<2x128xf32>
    %76 = tpu.matmul %75, %3, %cst_15 {dimension_numbers = #tpu.dot_dimension_numbers<[1], [0], [0], [1], [0, 0, 1, 1], [], []>} : vector<2x32xf32>, vector<32x128xf32>, vector<2x128xf32> -> vector<2x128xf32>
    %77 = arith.addf %17, %76 : vector<2x128xf32>
    %78 = arith.negf %77 : vector<2x128xf32>
    %79 = math.exp %78 : vector<2x128xf32>
    %cst_16 = arith.constant 1.000000e+00 : f32
    %80 = vector.broadcast %cst_16 : f32 to vector<2x128xf32>
    %81 = arith.addf %80, %79 : vector<2x128xf32>
    %82 = arith.divf %80, %81 : vector<2x128xf32>
    %83 = vector.extract_strided_slice %82 {offsets = [0, 0], sizes = [2, 32], strides = [1, 1]} : vector<2x128xf32> to vector<2x32xf32>
    %84 = vector.extract_strided_slice %82 {offsets = [0, 32], sizes = [2, 32], strides = [1, 1]} : vector<2x128xf32> to vector<2x32xf32>
    %85 = vector.extract_strided_slice %82 {offsets = [0, 64], sizes = [2, 32], strides = [1, 1]} : vector<2x128xf32> to vector<2x32xf32>
    %cst_17 = arith.constant 2.000000e+00 : f32
    %86 = vector.broadcast %cst_17 : f32 to vector<2x32xf32>
    %87 = arith.mulf %86, %85 : vector<2x32xf32>
    %cst_18 = arith.constant 1.000000e+00 : f32
    %88 = vector.broadcast %cst_18 : f32 to vector<2x32xf32>
    %89 = arith.subf %87, %88 : vector<2x32xf32>
    %90 = vector.extract_strided_slice %82 {offsets = [0, 96], sizes = [2, 32], strides = [1, 1]} : vector<2x128xf32> to vector<2x32xf32>
    %91 = arith.mulf %84, %73 : vector<2x32xf32>
    %92 = arith.mulf %83, %89 : vector<2x32xf32>
    %93 = arith.addf %91, %92 : vector<2x32xf32>
    %94 = math.tanh %93 : vector<2x32xf32>
    %95 = arith.mulf %90, %94 : vector<2x32xf32>
    %cst_19 = arith.constant dense<0.000000e+00> : vector<2x128xf32>
    %96 = tpu.matmul %95, %3, %cst_19 {dimension_numbers = #tpu.dot_dimension_numbers<[1], [0], [0], [1], [0, 0, 1, 1], [], []>} : vector<2x32xf32>, vector<32x128xf32>, vector<2x128xf32> -> vector<2x128xf32>
    %97 = arith.addf %23, %96 : vector<2x128xf32>
    %98 = arith.negf %97 : vector<2x128xf32>
    %99 = math.exp %98 : vector<2x128xf32>
    %cst_20 = arith.constant 1.000000e+00 : f32
    %100 = vector.broadcast %cst_20 : f32 to vector<2x128xf32>
    %101 = arith.addf %100, %99 : vector<2x128xf32>
    %102 = arith.divf %100, %101 : vector<2x128xf32>
    %103 = vector.extract_strided_slice %102 {offsets = [0, 0], sizes = [2, 32], strides = [1, 1]} : vector<2x128xf32> to vector<2x32xf32>
    %104 = vector.extract_strided_slice %102 {offsets = [0, 32], sizes = [2, 32], strides = [1, 1]} : vector<2x128xf32> to vector<2x32xf32>
    %105 = vector.extract_strided_slice %102 {offsets = [0, 64], sizes = [2, 32], strides = [1, 1]} : vector<2x128xf32> to vector<2x32xf32>
    %cst_21 = arith.constant 2.000000e+00 : f32
    %106 = vector.broadcast %cst_21 : f32 to vector<2x32xf32>
    %107 = arith.mulf %106, %105 : vector<2x32xf32>
    %cst_22 = arith.constant 1.000000e+00 : f32
    %108 = vector.broadcast %cst_22 : f32 to vector<2x32xf32>
    %109 = arith.subf %107, %108 : vector<2x32xf32>
    %110 = vector.extract_strided_slice %102 {offsets = [0, 96], sizes = [2, 32], strides = [1, 1]} : vector<2x128xf32> to vector<2x32xf32>
    %111 = arith.mulf %104, %93 : vector<2x32xf32>
    %112 = arith.mulf %103, %109 : vector<2x32xf32>
    %113 = arith.addf %111, %112 : vector<2x32xf32>
    %114 = math.tanh %113 : vector<2x32xf32>
    %115 = arith.mulf %110, %114 : vector<2x32xf32>
    %cst_23 = arith.constant dense<0.000000e+00> : vector<2x128xf32>
    %116 = tpu.matmul %115, %3, %cst_23 {dimension_numbers = #tpu.dot_dimension_numbers<[1], [0], [0], [1], [0, 0, 1, 1], [], []>} : vector<2x32xf32>, vector<32x128xf32>, vector<2x128xf32> -> vector<2x128xf32>
    %117 = arith.addf %29, %116 : vector<2x128xf32>
    %118 = arith.negf %117 : vector<2x128xf32>
    %119 = math.exp %118 : vector<2x128xf32>
    %cst_24 = arith.constant 1.000000e+00 : f32
    %120 = vector.broadcast %cst_24 : f32 to vector<2x128xf32>
    %121 = arith.addf %120, %119 : vector<2x128xf32>
    %122 = arith.divf %120, %121 : vector<2x128xf32>
    %123 = vector.extract_strided_slice %122 {offsets = [0, 0], sizes = [2, 32], strides = [1, 1]} : vector<2x128xf32> to vector<2x32xf32>
    %124 = vector.extract_strided_slice %122 {offsets = [0, 32], sizes = [2, 32], strides = [1, 1]} : vector<2x128xf32> to vector<2x32xf32>
    %125 = vector.extract_strided_slice %122 {offsets = [0, 64], sizes = [2, 32], strides = [1, 1]} : vector<2x128xf32> to vector<2x32xf32>
    %cst_25 = arith.constant 2.000000e+00 : f32
    %126 = vector.broadcast %cst_25 : f32 to vector<2x32xf32>
    %127 = arith.mulf %126, %125 : vector<2x32xf32>
    %cst_26 = arith.constant 1.000000e+00 : f32
    %128 = vector.broadcast %cst_26 : f32 to vector<2x32xf32>
    %129 = arith.subf %127, %128 : vector<2x32xf32>
    %130 = vector.extract_strided_slice %122 {offsets = [0, 96], sizes = [2, 32], strides = [1, 1]} : vector<2x128xf32> to vector<2x32xf32>
    %131 = arith.mulf %124, %113 : vector<2x32xf32>
    %132 = arith.mulf %123, %129 : vector<2x32xf32>
    %133 = arith.addf %131, %132 : vector<2x32xf32>
    %134 = math.tanh %133 : vector<2x32xf32>
    %135 = arith.mulf %130, %134 : vector<2x32xf32>
    %cst_27 = arith.constant dense<0.000000e+00> : vector<2x128xf32>
    %136 = tpu.matmul %135, %3, %cst_27 {dimension_numbers = #tpu.dot_dimension_numbers<[1], [0], [0], [1], [0, 0, 1, 1], [], []>} : vector<2x32xf32>, vector<32x128xf32>, vector<2x128xf32> -> vector<2x128xf32>
    %137 = arith.addf %35, %136 : vector<2x128xf32>
    %138 = arith.negf %137 : vector<2x128xf32>
    %139 = math.exp %138 : vector<2x128xf32>
    %cst_28 = arith.constant 1.000000e+00 : f32
    %140 = vector.broadcast %cst_28 : f32 to vector<2x128xf32>
    %141 = arith.addf %140, %139 : vector<2x128xf32>
    %142 = arith.divf %140, %141 : vector<2x128xf32>
    %143 = vector.extract_strided_slice %142 {offsets = [0, 0], sizes = [2, 32], strides = [1, 1]} : vector<2x128xf32> to vector<2x32xf32>
    %144 = vector.extract_strided_slice %142 {offsets = [0, 32], sizes = [2, 32], strides = [1, 1]} : vector<2x128xf32> to vector<2x32xf32>
    %145 = vector.extract_strided_slice %142 {offsets = [0, 64], sizes = [2, 32], strides = [1, 1]} : vector<2x128xf32> to vector<2x32xf32>
    %cst_29 = arith.constant 2.000000e+00 : f32
    %146 = vector.broadcast %cst_29 : f32 to vector<2x32xf32>
    %147 = arith.mulf %146, %145 : vector<2x32xf32>
    %cst_30 = arith.constant 1.000000e+00 : f32
    %148 = vector.broadcast %cst_30 : f32 to vector<2x32xf32>
    %149 = arith.subf %147, %148 : vector<2x32xf32>
    %150 = vector.extract_strided_slice %142 {offsets = [0, 96], sizes = [2, 32], strides = [1, 1]} : vector<2x128xf32> to vector<2x32xf32>
    %151 = arith.mulf %144, %133 : vector<2x32xf32>
    %152 = arith.mulf %143, %149 : vector<2x32xf32>
    %153 = arith.addf %151, %152 : vector<2x32xf32>
    %154 = math.tanh %153 : vector<2x32xf32>
    %155 = arith.mulf %150, %154 : vector<2x32xf32>
    %cst_31 = arith.constant dense<0.000000e+00> : vector<2x128xf32>
    %156 = tpu.matmul %155, %3, %cst_31 {dimension_numbers = #tpu.dot_dimension_numbers<[1], [0], [0], [1], [0, 0, 1, 1], [], []>} : vector<2x32xf32>, vector<32x128xf32>, vector<2x128xf32> -> vector<2x128xf32>
    %157 = arith.addf %41, %156 : vector<2x128xf32>
    %158 = arith.negf %157 : vector<2x128xf32>
    %159 = math.exp %158 : vector<2x128xf32>
    %cst_32 = arith.constant 1.000000e+00 : f32
    %160 = vector.broadcast %cst_32 : f32 to vector<2x128xf32>
    %161 = arith.addf %160, %159 : vector<2x128xf32>
    %162 = arith.divf %160, %161 : vector<2x128xf32>
    %163 = vector.extract_strided_slice %162 {offsets = [0, 0], sizes = [2, 32], strides = [1, 1]} : vector<2x128xf32> to vector<2x32xf32>
    %164 = vector.extract_strided_slice %162 {offsets = [0, 32], sizes = [2, 32], strides = [1, 1]} : vector<2x128xf32> to vector<2x32xf32>
    %165 = vector.extract_strided_slice %162 {offsets = [0, 64], sizes = [2, 32], strides = [1, 1]} : vector<2x128xf32> to vector<2x32xf32>
    %cst_33 = arith.constant 2.000000e+00 : f32
    %166 = vector.broadcast %cst_33 : f32 to vector<2x32xf32>
    %167 = arith.mulf %166, %165 : vector<2x32xf32>
    %cst_34 = arith.constant 1.000000e+00 : f32
    %168 = vector.broadcast %cst_34 : f32 to vector<2x32xf32>
    %169 = arith.subf %167, %168 : vector<2x32xf32>
    %170 = vector.extract_strided_slice %162 {offsets = [0, 96], sizes = [2, 32], strides = [1, 1]} : vector<2x128xf32> to vector<2x32xf32>
    %171 = arith.mulf %164, %153 : vector<2x32xf32>
    %172 = arith.mulf %163, %169 : vector<2x32xf32>
    %173 = arith.addf %171, %172 : vector<2x32xf32>
    %174 = math.tanh %173 : vector<2x32xf32>
    %175 = arith.mulf %170, %174 : vector<2x32xf32>
    %cst_35 = arith.constant dense<0.000000e+00> : vector<2x128xf32>
    %176 = tpu.matmul %175, %3, %cst_35 {dimension_numbers = #tpu.dot_dimension_numbers<[1], [0], [0], [1], [0, 0, 1, 1], [], []>} : vector<2x32xf32>, vector<32x128xf32>, vector<2x128xf32> -> vector<2x128xf32>
    %177 = arith.addf %47, %176 : vector<2x128xf32>
    %178 = arith.negf %177 : vector<2x128xf32>
    %179 = math.exp %178 : vector<2x128xf32>
    %cst_36 = arith.constant 1.000000e+00 : f32
    %180 = vector.broadcast %cst_36 : f32 to vector<2x128xf32>
    %181 = arith.addf %180, %179 : vector<2x128xf32>
    %182 = arith.divf %180, %181 : vector<2x128xf32>
    %183 = vector.extract_strided_slice %182 {offsets = [0, 0], sizes = [2, 32], strides = [1, 1]} : vector<2x128xf32> to vector<2x32xf32>
    %184 = vector.extract_strided_slice %182 {offsets = [0, 32], sizes = [2, 32], strides = [1, 1]} : vector<2x128xf32> to vector<2x32xf32>
    %185 = vector.extract_strided_slice %182 {offsets = [0, 64], sizes = [2, 32], strides = [1, 1]} : vector<2x128xf32> to vector<2x32xf32>
    %cst_37 = arith.constant 2.000000e+00 : f32
    %186 = vector.broadcast %cst_37 : f32 to vector<2x32xf32>
    %187 = arith.mulf %186, %185 : vector<2x32xf32>
    %cst_38 = arith.constant 1.000000e+00 : f32
    %188 = vector.broadcast %cst_38 : f32 to vector<2x32xf32>
    %189 = arith.subf %187, %188 : vector<2x32xf32>
    %190 = vector.extract_strided_slice %182 {offsets = [0, 96], sizes = [2, 32], strides = [1, 1]} : vector<2x128xf32> to vector<2x32xf32>
    %191 = arith.mulf %184, %173 : vector<2x32xf32>
    %192 = arith.mulf %183, %189 : vector<2x32xf32>
    %193 = arith.addf %191, %192 : vector<2x32xf32>
    %194 = math.tanh %193 : vector<2x32xf32>
    %195 = arith.mulf %190, %194 : vector<2x32xf32>
    %cst_39 = arith.constant dense<0.000000e+00> : vector<2x128xf32>
    %196 = tpu.matmul %195, %3, %cst_39 {dimension_numbers = #tpu.dot_dimension_numbers<[1], [0], [0], [1], [0, 0, 1, 1], [], []>} : vector<2x32xf32>, vector<32x128xf32>, vector<2x128xf32> -> vector<2x128xf32>
    %197 = arith.addf %53, %196 : vector<2x128xf32>
    %198 = arith.negf %197 : vector<2x128xf32>
    %199 = math.exp %198 : vector<2x128xf32>
    %cst_40 = arith.constant 1.000000e+00 : f32
    %200 = vector.broadcast %cst_40 : f32 to vector<2x128xf32>
    %201 = arith.addf %200, %199 : vector<2x128xf32>
    %202 = arith.divf %200, %201 : vector<2x128xf32>
    %203 = vector.extract_strided_slice %202 {offsets = [0, 0], sizes = [2, 32], strides = [1, 1]} : vector<2x128xf32> to vector<2x32xf32>
    %204 = vector.extract_strided_slice %202 {offsets = [0, 32], sizes = [2, 32], strides = [1, 1]} : vector<2x128xf32> to vector<2x32xf32>
    %205 = vector.extract_strided_slice %202 {offsets = [0, 64], sizes = [2, 32], strides = [1, 1]} : vector<2x128xf32> to vector<2x32xf32>
    %cst_41 = arith.constant 2.000000e+00 : f32
    %206 = vector.broadcast %cst_41 : f32 to vector<2x32xf32>
    %207 = arith.mulf %206, %205 : vector<2x32xf32>
    %cst_42 = arith.constant 1.000000e+00 : f32
    %208 = vector.broadcast %cst_42 : f32 to vector<2x32xf32>
    %209 = arith.subf %207, %208 : vector<2x32xf32>
    %210 = vector.extract_strided_slice %202 {offsets = [0, 96], sizes = [2, 32], strides = [1, 1]} : vector<2x128xf32> to vector<2x32xf32>
    %211 = arith.mulf %204, %193 : vector<2x32xf32>
    %212 = arith.mulf %203, %209 : vector<2x32xf32>
    %213 = arith.addf %211, %212 : vector<2x32xf32>
    %214 = math.tanh %213 : vector<2x32xf32>
    %215 = arith.mulf %210, %214 : vector<2x32xf32>
    %cst_43 = arith.constant dense<0.000000e+00> : vector<2x128xf32>
    %216 = tpu.matmul %215, %4, %cst_43 {dimension_numbers = #tpu.dot_dimension_numbers<[1], [0], [0], [1], [0, 0, 1, 1], [], []>} : vector<2x32xf32>, vector<32x128xf32>, vector<2x128xf32> -> vector<2x128xf32>
    %217 = vector.broadcast %2 : vector<1x128xf32> to vector<2x128xf32>
    %218 = arith.addf %216, %217 : vector<2x128xf32>
    %c0_44 = arith.constant 0 : index
    %c0_45 = arith.constant 0 : index
    %219 = vector.load %arg4[%c0_44, %c0_45] : memref<2x128xf32, #tpu.memory_space<vmem>>, vector<2x128xf32>
    tpu.vector_store %arg4[%c0_44, %c0_45], %218 {strides = array<i32>} : memref<2x128xf32, #tpu.memory_space<vmem>>, vector<2x128xf32>,
    return
  }
}

</mosaic_0001>

<llo_original>
// kernel: tpu_custom_call.1
$region0: #{tpu_custom_call.1}
  #allocation0 [shape = 'u32[]', space=smem, size = 0x4, offset = 0x4, fixed_abs, tag = 'smem constant byte address 0x4 - core index']
  #allocation1 [shape = 'u32[144,128]{1,0:T(1,128)}', space=vmem, size = 0x12000, scoped, tag = 'internal scratch']
  %s0 = inlined_call_operand.hbm [shape: f32[2,8], index: 0, kind: input, shape index: {}]
  %s1 = inlined_call_operand.hbm [shape: f32[4,32], index: 1, kind: input, shape index: {}]
  %s2 = inlined_call_operand.vmem [shape: f32[3,128], index: 2, kind: input, shape index: {}]
  %s3 = inlined_call_operand.hbm [shape: f32[64,128], index: 3, kind: input, shape index: {}]
  %s4 = inlined_call_operand.hbm [shape: f32[2,128], index: 4, kind: output, shape index: {}]
  %s5 = sld [smem:[#allocation0]]
  $region38: #{tpu_custom_call.1} parent=0
    _
  %s7 = ssub.s32 1, %s5
  %s8 = scalar_select 0, %s7, %s5
  $region1: #{tpu_custom_call.1} parent=0
    #allocation2 [shape = 'u8[1024]{0}', space=vmem, size = 0x400, scoped, tag = 'input window, operand 0, single buffered']
    #allocation3 [shape = 's32[1]{0}', space=sflag, size = 0x4, scoped, tag = 'scoped memory for tpu_custom_call.1']
    #allocation4 [shape = 's32[1]{0}', space=sflag, size = 0x4, scoped, tag = 'scoped memory for tpu_custom_call.1']
    #allocation5 [shape = 'u8[2048]{0}', space=vmem, size = 0x800, scoped, tag = 'input window, operand 1, single buffered']
    #allocation6 [shape = 's32[1]{0}', space=sflag, size = 0x4, scoped, tag = 'scoped memory for tpu_custom_call.1']
    #allocation7 [shape = 'u8[32768]{0}', space=vmem, size = 0x8000, scoped, tag = 'input window, operand 3, single buffered']
    #allocation8 [shape = 'u8[1024]{0}', space=vmem, size = 0x400, scoped, tag = 'output window, operand 0, single buffered']
    %9 = vsyncpa [#allocation3], 0
    %10 = vsyncpa [#allocation6], 0
    %11 = vsyncpa [#allocation4], 0
    // Predicated region
    $region2: #{tpu_custom_call.1} parent=1 // pred_check
      _
    $region3: #{tpu_custom_call.1} parent=1 // pred_check_branch
      %13 = sbr.rel (0) target = $region5
    $region4: #{tpu_custom_call.1} parent=1 // pred_region
      %s15 = ssub.s32 32, 32
      %16 = vsyncadd [#allocation3], %s15
      %s18 = sshll.u32 [#allocation2], 4
      %s19 = int_to_ptr.vmem [resolvable:$true] %s18
      %21 = dma.hbm_to_vmem [thread:$0]  %s0, 32, %s19, [#allocation3]
    $region5: #{tpu_custom_call.1} parent=1 // pred_fallthru
      _
    // Predicated region
    $region6: #{tpu_custom_call.1} parent=1 // pred_check
      _
    $region7: #{tpu_custom_call.1} parent=1 // pred_check_branch
      %23 = sbr.rel (0) target = $region9
    $region8: #{tpu_custom_call.1} parent=1 // pred_region
      %s25 = ssub.s32 64, 64
      %26 = vsyncadd [#allocation6], %s25
      %s28 = sshll.u32 [#allocation5], 4
      %s29 = int_to_ptr.vmem [resolvable:$true] %s28
      %31 = dma.hbm_to_vmem [thread:$0]  %s1, 64, %s29, [#allocation6]
    $region9: #{tpu_custom_call.1} parent=1 // pred_fallthru
      _
    // Predicated region
    $region10: #{tpu_custom_call.1} parent=1 // pred_check
      _
    $region11: #{tpu_custom_call.1} parent=1 // pred_check_branch
      %33 = sbr.rel (0) target = $region13
    $region12: #{tpu_custom_call.1} parent=1 // pred_region
      _
    $region13: #{tpu_custom_call.1} parent=1 // pred_fallthru
      _
    // Predicated region
    $region14: #{tpu_custom_call.1} parent=1 // pred_check
      _
    $region15: #{tpu_custom_call.1} parent=1 // pred_check_branch
      %35 = sbr.rel (0) target = $region17
    $region16: #{tpu_custom_call.1} parent=1 // pred_region
      %s37 = ssub.s32 1024, 1024
      %38 = vsyncadd [#allocation6], %s37
      %s39 = sshll.u32 [#allocation7], 4
      %s40 = int_to_ptr.vmem [resolvable:$true] %s39
      %45 = dma.hbm_to_vmem [thread:$0]  %s3, 1024, %s40, [#allocation6], 128, 128, 8
    $region17: #{tpu_custom_call.1} parent=1 // pred_fallthru
      _
    // Predicated region
    $region18: #{tpu_custom_call.1} parent=1 // pred_check
      _
    $region19: #{tpu_custom_call.1} parent=1 // pred_check_branch
      %47 = sbr.rel (0) target = $region21
    $region20: #{tpu_custom_call.1} parent=1 // pred_region
      %48 = dma.done [#allocation3], 32
    $region21: #{tpu_custom_call.1} parent=1 // pred_fallthru
      _
    // Predicated region
    $region22: #{tpu_custom_call.1} parent=1 // pred_check
      _
    $region23: #{tpu_custom_call.1} parent=1 // pred_check_branch
      %50 = sbr.rel (0) target = $region25
    $region24: #{tpu_custom_call.1} parent=1 // pred_region
      %51 = dma.done [#allocation6], 64
    $region25: #{tpu_custom_call.1} parent=1 // pred_fallthru
      _
    // Predicated region
    $region26: #{tpu_custom_call.1} parent=1 // pred_check
      _
    $region27: #{tpu_custom_call.1} parent=1 // pred_check_branch
      %53 = sbr.rel (0) target = $region29
    $region28: #{tpu_custom_call.1} parent=1 // pred_region
      %54 = dma.done [#allocation6], 1024
    $region29: #{tpu_custom_call.1} parent=1 // pred_fallthru
      _
    %v55 = vld [vmem:[%s2] sm:$0x1]
    %v56 = vld [vmem:[%s2 + $0x1] sm:$0x1]
    %v57 = vld [vmem:[%s2 + $0x2] sm:$0x1]
    %v58 = vld [vmem:[#allocation7] sm:$0xff]
    %v59 = vld [vmem:[#allocation7 + $0x8] sm:$0xff]
    %v60 = vld [vmem:[#allocation7 + $0x10] sm:$0xff]
    %v61 = vld [vmem:[#allocation7 + $0x18] sm:$0xff]
    %v62 = vld [vmem:[#allocation7 + $0x20] sm:$0xff]
    %v63 = vld [vmem:[#allocation7 + $0x28] sm:$0xff]
    %v64 = vld [vmem:[#allocation7 + $0x30] sm:$0xff]
    %v65 = vld [vmem:[#allocation7 + $0x38] sm:$0xff]
    %v66 = vld [vmem:[#allocation2] sm:$0x3]
    %68 = vset.pattern.permute.xlu0 0
    %69 = vperm.xlu0 %68, %v66
    %v70 = vpop.permute.xlu0 %69
    %v72 = vlaneseq
    %v73 = vshrl.u32 %v72, 7
    %v74 = vsub.s32 0, %v73
    %v75 = vrot.slane %v55, %v74
    %v76 = vmul.f32 %v70, %v75
    %v77 = vlaneseq
    %v78 = vshrl.u32 %v77, 7
    %v79 = vsub.s32 0, %v78
    %v80 = vrot.slane %v56, %v79
    %v81 = vadd.f32 %v76, %v80
    %82 = vset.pattern.permute.xlu0 1
    %83 = vperm.xlu0 %82, %v66
    %v84 = vpop.permute.xlu0 %83
    %v86 = vmul.f32 %v84, %v75
    %v87 = vadd.f32 %v86, %v80
    %88 = vset.pattern.permute.xlu0 2
    %89 = vperm.xlu0 %88, %v66
    %v90 = vpop.permute.xlu0 %89
    %v92 = vmul.f32 %v90, %v75
    %v93 = vadd.f32 %v92, %v80
    %94 = vset.pattern.permute.xlu0 3
    %95 = vperm.xlu0 %94, %v66
    %v96 = vpop.permute.xlu0 %95
    %v98 = vmul.f32 %v96, %v75
    %v99 = vadd.f32 %v98, %v80
    %100 = vset.pattern.permute.xlu0 4
    %101 = vperm.xlu0 %100, %v66
    %v102 = vpop.permute.xlu0 %101
    %v104 = vmul.f32 %v102, %v75
    %v105 = vadd.f32 %v104, %v80
    %106 = vset.pattern.permute.xlu0 5
    %107 = vperm.xlu0 %106, %v66
    %v108 = vpop.permute.xlu0 %107
    %v110 = vmul.f32 %v108, %v75
    %v111 = vadd.f32 %v110, %v80
    %112 = vset.pattern.permute.xlu0 6
    %113 = vperm.xlu0 %112, %v66
    %v114 = vpop.permute.xlu0 %113
    %v116 = vmul.f32 %v114, %v75
    %v117 = vadd.f32 %v116, %v80
    %118 = vset.pattern.permute.xlu0 7
    %119 = vperm.xlu0 %118, %v66
    %v120 = vpop.permute.xlu0 %119
    %v122 = vmul.f32 %v120, %v75
    %v123 = vadd.f32 %v122, %v80
    %v124 = vld [vmem:[#allocation5] sm:$0x3]
    %v125 = vld [vmem:[#allocation5 + $0x2] sm:$0x3]
    %vm126 = vcmask 261120
    %v128 = vsel %vm126, %v124, 0
    %130 = vmatprep.subr.mxu0 0.0
    %131 = vmatpush1.msra.mxu0 %v58
    %132 = vmatprep.subr.mxu0 0.0
    %133 = vmatpush1.msra.mxu0 %v59
    %134 = vmatprep.subr.mxu0 0.0
    %135 = vmatpush1.msra.mxu0 %v60
    %136 = vmatprep.subr.mxu0 0.0
    %137 = vmatpush1.msra.mxu0 %v61
    %138 = vmatprep.subr.mxu0 0.0
    %139 = vmatpush1.msra.mxu0 0.0
    %140 = vmatprep.subr.mxu0 0.0
    %141 = vmatpush1.msra.mxu0 0.0
    %142 = vmatprep.subr.mxu0 0.0
    %143 = vmatpush1.msra.mxu0 0.0
    %144 = vmatprep.subr.mxu0 0.0
    %145 = vmatpush1.msra.mxu0 0.0
    %146 = vmatprep.subr.mxu0 0.0
    %147 = vmatpush1.msra.mxu0 0.0
    %148 = vmatprep.subr.mxu0 0.0
    %149 = vmatpush1.msra.mxu0 0.0
    %150 = vmatprep.subr.mxu0 0.0
    %151 = vmatpush1.msra.mxu0 0.0
    %152 = vmatprep.subr.mxu0 0.0
    %153 = vmatpush1.msra.mxu0 0.0
    %154 = vmatprep.subr.mxu0 0.0
    %155 = vmatpush1.msra.mxu0 0.0
    %156 = vmatprep.subr.mxu0 0.0
    %157 = vmatpush1.msra.mxu0 0.0
    %158 = vmatprep.subr.mxu0 0.0
    %159 = vmatpush1.msra.mxu0 0.0
    %160 = vmatprep.subr.mxu0 0.0
    %161 = vmatpush1.msra.mxu0 0.0
    %162 = vmatprep.subr.mxu0 0.0
    %163 = vmatpush1.msra.mxu0 0.0
    %164 = vmatprep.subr.mxu0 0.0
    %165 = vmatpush1.msra.mxu0 0.0
    %166 = vmatprep.subr.mxu0 0.0
    %167 = vmatpush1.msra.mxu0 0.0
    %168 = vmatprep.subr.mxu0 0.0
    %169 = vmatpush1.msra.mxu0 0.0
    %170 = vmatprep.subr.mxu0 0.0
    %171 = vmatpush1.msra.mxu0 0.0
    %172 = vmatprep.subr.mxu0 0.0
    %173 = vmatpush1.msra.mxu0 0.0
    %174 = vmatprep.subr.mxu0 0.0
    %175 = vmatpush1.msra.mxu0 0.0
    %176 = vmatprep.subr.mxu0 0.0
    %177 = vmatpush1.msra.mxu0 0.0
    %178 = vmatprep.subr.mxu0 0.0
    %179 = vmatpush1.msra.mxu0 0.0
    %180 = vmatprep.subr.mxu0 0.0
    %181 = vmatpush1.msra.mxu0 0.0
    %182 = vmatprep.subr.mxu0 0.0
    %183 = vmatpush1.msra.mxu0 0.0
    %184 = vmatprep.subr.mxu0 0.0
    %185 = vmatpush1.msra.mxu0 0.0
    %186 = vmatprep.subr.mxu0 0.0
    %187 = vmatpush1.msra.mxu0 0.0
    %188 = vmatprep.subr.mxu0 0.0
    %189 = vmatpush1.msra.mxu0 0.0
    %190 = vmatprep.subr.mxu0 0.0
    %191 = vmatpush1.msra.mxu0 0.0
    %192 = vmatprep.subr.mxu0 0.0
    %193 = vmatpush1.msra.mxu0 0.0
    %194 = vmatprep.mubr.f32.mxu0 0.0
    %195 = vmatmul.mubr.f32.gmra.mrb[0].mxu0 %v128
    %v196 = vpop.f32.mrb[0].mxu0
    %v197 = vadd.f32 0.0, %v196
    %v198 = vpop.f32.mrb[0].mxu0
    %199 = vdwg.mxu0
    %v200 = vadd.f32 %v81, %v197
    %v201 = vxor.u32 %v200, 2147483648
    %v202 = vmul.f32 %v201, 1.442695
    %v203 = vpow.pop %v202
    %v204 = vadd.f32 %v203, 1.0
    %v205 = vrcp.pop %v204
    %v206 = vmul.f32 1.0, %v205
    %v207 = vmul.f32 %v206, 2.0
    %v208 = vsub.f32 %v207, 1.0
    %210 = vrot.lane.b32.xlu0 %v125, 32
    %v211 = vpop.permute.xlu0 %210
    %v213 = vmul.f32 %v206, %v211
    %215 = vrot.lane.b32.xlu0 %v208, 64
    %v216 = vpop.permute.xlu0 %215
    %v218 = vmul.f32 %v206, %v216
    %220 = vrot.lane.b32.xlu0 %v218, 32
    %v221 = vpop.permute.xlu0 %220
    %v223 = vadd.f32 %v213, %v221
    %v224 = vtanh.pop %v223
    %226 = vrot.lane.b32.xlu0 %v224, 64
    %v227 = vpop.permute.xlu0 %226
    %v229 = vmul.f32 %v206, %v227
    %231 = vrot.lane.b32.xlu0 %v229, 32
    %v232 = vpop.permute.xlu0 %231
    %v233 = vsel %vm126, %v232, 0
    %235 = vmatprep.subr.mxu0 0.0
    %236 = vmatpush1.msra.mxu0 %v58
    %237 = vmatprep.subr.mxu0 0.0
    %238 = vmatpush1.msra.mxu0 %v59
    %239 = vmatprep.subr.mxu0 0.0
    %240 = vmatpush1.msra.mxu0 %v60
    %241 = vmatprep.subr.mxu0 0.0
    %242 = vmatpush1.msra.mxu0 %v61
    %243 = vmatprep.subr.mxu0 0.0
    %244 = vmatpush1.msra.mxu0 0.0
    %245 = vmatprep.subr.mxu0 0.0
    %246 = vmatpush1.msra.mxu0 0.0
    %247 = vmatprep.subr.mxu0 0.0
    %248 = vmatpush1.msra.mxu0 0.0
    %249 = vmatprep.subr.mxu0 0.0
    %250 = vmatpush1.msra.mxu0 0.0
    %251 = vmatprep.subr.mxu0 0.0
    %252 = vmatpush1.msra.mxu0 0.0
    %253 = vmatprep.subr.mxu0 0.0
    %254 = vmatpush1.msra.mxu0 0.0
    %255 = vmatprep.subr.mxu0 0.0
    %256 = vmatpush1.msra.mxu0 0.0
    %257 = vmatprep.subr.mxu0 0.0
    %258 = vmatpush1.msra.mxu0 0.0
    %259 = vmatprep.subr.mxu0 0.0
    %260 = vmatpush1.msra.mxu0 0.0
    %261 = vmatprep.subr.mxu0 0.0
    %262 = vmatpush1.msra.mxu0 0.0
    %263 = vmatprep.subr.mxu0 0.0
    %264 = vmatpush1.msra.mxu0 0.0
    %265 = vmatprep.subr.mxu0 0.0
    %266 = vmatpush1.msra.mxu0 0.0
    %267 = vmatprep.subr.mxu0 0.0
    %268 = vmatpush1.msra.mxu0 0.0
    %269 = vmatprep.subr.mxu0 0.0
    %270 = vmatpush1.msra.mxu0 0.0
    %271 = vmatprep.subr.mxu0 0.0
    %272 = vmatpush1.msra.mxu0 0.0
    %273 = vmatprep.subr.mxu0 0.0
    %274 = vmatpush1.msra.mxu0 0.0
    %275 = vmatprep.subr.mxu0 0.0
    %276 = vmatpush1.msra.mxu0 0.0
    %277 = vmatprep.subr.mxu0 0.0
    %278 = vmatpush1.msra.mxu0 0.0
    %279 = vmatprep.subr.mxu0 0.0
    %280 = vmatpush1.msra.mxu0 0.0
    %281 = vmatprep.subr.mxu0 0.0
    %282 = vmatpush1.msra.mxu0 0.0
    %283 = vmatprep.subr.mxu0 0.0
    %284 = vmatpush1.msra.mxu0 0.0
    %285 = vmatprep.subr.mxu0 0.0
    %286 = vmatpush1.msra.mxu0 0.0
    %287 = vmatprep.subr.mxu0 0.0
    %288 = vmatpush1.msra.mxu0 0.0
    %289 = vmatprep.subr.mxu0 0.0
    %290 = vmatpush1.msra.mxu0 0.0
    %291 = vmatprep.subr.mxu0 0.0
    %292 = vmatpush1.msra.mxu0 0.0
    %293 = vmatprep.subr.mxu0 0.0
    %294 = vmatpush1.msra.mxu0 0.0
    %295 = vmatprep.subr.mxu0 0.0
    %296 = vmatpush1.msra.mxu0 0.0
    %297 = vmatprep.subr.mxu0 0.0
    %298 = vmatpush1.msra.mxu0 0.0
    %299 = vmatprep.mubr.f32.mxu0 0.0
    %300 = vmatmul.mubr.f32.gmra.mrb[0].mxu0 %v233
    %v301 = vpop.f32.mrb[0].mxu0
    %v302 = vadd.f32 0.0, %v301
    %v303 = vpop.f32.mrb[0].mxu0
    %304 = vdwg.mxu0
    %v305 = vadd.f32 %v87, %v302
    %v306 = vxor.u32 %v305, 2147483648
    %v307 = vmul.f32 %v306, 1.442695
    %v308 = vpow.pop %v307
    %v309 = vadd.f32 %v308, 1.0
    %v310 = vrcp.pop %v309
    %v311 = vmul.f32 1.0, %v310
    %v312 = vmul.f32 %v311, 2.0
    %v313 = vsub.f32 %v312, 1.0
    %v314 = vmul.f32 %v311, %v223
    %316 = vrot.lane.b32.xlu0 %v313, 64
    %v317 = vpop.permute.xlu0 %316
    %v319 = vmul.f32 %v311, %v317
    %321 = vrot.lane.b32.xlu0 %v319, 32
    %v322 = vpop.permute.xlu0 %321
    %v324 = vadd.f32 %v314, %v322
    %v325 = vtanh.pop %v324
    %327 = vrot.lane.b32.xlu0 %v325, 64
    %v328 = vpop.permute.xlu0 %327
    %v330 = vmul.f32 %v311, %v328
    %332 = vrot.lane.b32.xlu0 %v330, 32
    %v333 = vpop.permute.xlu0 %332
    %v334 = vsel %vm126, %v333, 0
    %336 = vmatprep.subr.mxu0 0.0
    %337 = vmatpush1.msra.mxu0 %v58
    %338 = vmatprep.subr.mxu0 0.0
    %339 = vmatpush1.msra.mxu0 %v59
    %340 = vmatprep.subr.mxu0 0.0
    %341 = vmatpush1.msra.mxu0 %v60
    %342 = vmatprep.subr.mxu0 0.0
    %343 = vmatpush1.msra.mxu0 %v61
    %344 = vmatprep.subr.mxu0 0.0
    %345 = vmatpush1.msra.mxu0 0.0
    %346 = vmatprep.subr.mxu0 0.0
    %347 = vmatpush1.msra.mxu0 0.0
    %348 = vmatprep.subr.mxu0 0.0
    %349 = vmatpush1.msra.mxu0 0.0
    %350 = vmatprep.subr.mxu0 0.0
    %351 = vmatpush1.msra.mxu0 0.0
    %352 = vmatprep.subr.mxu0 0.0
    %353 = vmatpush1.msra.mxu0 0.0
    %354 = vmatprep.subr.mxu0 0.0
    %355 = vmatpush1.msra.mxu0 0.0
    %356 = vmatprep.subr.mxu0 0.0
    %357 = vmatpush1.msra.mxu0 0.0
    %358 = vmatprep.subr.mxu0 0.0
    %359 = vmatpush1.msra.mxu0 0.0
    %360 = vmatprep.subr.mxu0 0.0
    %361 = vmatpush1.msra.mxu0 0.0
    %362 = vmatprep.subr.mxu0 0.0
    %363 = vmatpush1.msra.mxu0 0.0
    %364 = vmatprep.subr.mxu0 0.0
    %365 = vmatpush1.msra.mxu0 0.0
    %366 = vmatprep.subr.mxu0 0.0
    %367 = vmatpush1.msra.mxu0 0.0
    %368 = vmatprep.subr.mxu0 0.0
    %369 = vmatpush1.msra.mxu0 0.0
    %370 = vmatprep.subr.mxu0 0.0
    %371 = vmatpush1.msra.mxu0 0.0
    %372 = vmatprep.subr.mxu0 0.0
    %373 = vmatpush1.msra.mxu0 0.0
    %374 = vmatprep.subr.mxu0 0.0
    %375 = vmatpush1.msra.mxu0 0.0
    %376 = vmatprep.subr.mxu0 0.0
    %377 = vmatpush1.msra.mxu0 0.0
    %378 = vmatprep.subr.mxu0 0.0
    %379 = vmatpush1.msra.mxu0 0.0
    %380 = vmatprep.subr.mxu0 0.0
    %381 = vmatpush1.msra.mxu0 0.0
    %382 = vmatprep.subr.mxu0 0.0
    %383 = vmatpush1.msra.mxu0 0.0
    %384 = vmatprep.subr.mxu0 0.0
    %385 = vmatpush1.msra.mxu0 0.0
    %386 = vmatprep.subr.mxu0 0.0
    %387 = vmatpush1.msra.mxu0 0.0
    %388 = vmatprep.subr.mxu0 0.0
    %389 = vmatpush1.msra.mxu0 0.0
    %390 = vmatprep.subr.mxu0 0.0
    %391 = vmatpush1.msra.mxu0 0.0
    %392 = vmatprep.subr.mxu0 0.0
    %393 = vmatpush1.msra.mxu0 0.0
    %394 = vmatprep.subr.mxu0 0.0
    %395 = vmatpush1.msra.mxu0 0.0
    %396 = vmatprep.subr.mxu0 0.0
    %397 = vmatpush1.msra.mxu0 0.0
    %398 = vmatprep.subr.mxu0 0.0
    %399 = vmatpush1.msra.mxu0 0.0
    %400 = vmatprep.mubr.f32.mxu0 0.0
    %401 = vmatmul.mubr.f32.gmra.mrb[0].mxu0 %v334
    %v402 = vpop.f32.mrb[0].mxu0
    %v403 = vadd.f32 0.0, %v402
    %v404 = vpop.f32.mrb[0].mxu0
    %405 = vdwg.mxu0
    %v406 = vadd.f32 %v93, %v403
    %v407 = vxor.u32 %v406, 2147483648
    %v408 = vmul.f32 %v407, 1.442695
    %v409 = vpow.pop %v408
    %v410 = vadd.f32 %v409, 1.0
    %v411 = vrcp.pop %v410
    %v412 = vmul.f32 1.0, %v411
    %v413 = vmul.f32 %v412, 2.0
    %v414 = vsub.f32 %v413, 1.0
    %v415 = vmul.f32 %v412, %v324
    %417 = vrot.lane.b32.xlu0 %v414, 64
    %v418 = vpop.permute.xlu0 %417
    %v420 = vmul.f32 %v412, %v418
    %422 = vrot.lane.b32.xlu0 %v420, 32
    %v423 = vpop.permute.xlu0 %422
    %v425 = vadd.f32 %v415, %v423
    %v426 = vtanh.pop %v425
    %428 = vrot.lane.b32.xlu0 %v426, 64
    %v429 = vpop.permute.xlu0 %428
    %v431 = vmul.f32 %v412, %v429
    %433 = vrot.lane.b32.xlu0 %v431, 32
    %v434 = vpop.permute.xlu0 %433
    %v435 = vsel %vm126, %v434, 0
    %437 = vmatprep.subr.mxu0 0.0
    %438 = vmatpush1.msra.mxu0 %v58
    %439 = vmatprep.subr.mxu0 0.0
    %440 = vmatpush1.msra.mxu0 %v59
    %441 = vmatprep.subr.mxu0 0.0
    %442 = vmatpush1.msra.mxu0 %v60
    %443 = vmatprep.subr.mxu0 0.0
    %444 = vmatpush1.msra.mxu0 %v61
    %445 = vmatprep.subr.mxu0 0.0
    %446 = vmatpush1.msra.mxu0 0.0
    %447 = vmatprep.subr.mxu0 0.0
    %448 = vmatpush1.msra.mxu0 0.0
    %449 = vmatprep.subr.mxu0 0.0
    %450 = vmatpush1.msra.mxu0 0.0
    %451 = vmatprep.subr.mxu0 0.0
    %452 = vmatpush1.msra.mxu0 0.0
    %453 = vmatprep.subr.mxu0 0.0
    %454 = vmatpush1.msra.mxu0 0.0
    %455 = vmatprep.subr.mxu0 0.0
    %456 = vmatpush1.msra.mxu0 0.0
    %457 = vmatprep.subr.mxu0 0.0
    %458 = vmatpush1.msra.mxu0 0.0
    %459 = vmatprep.subr.mxu0 0.0
    %460 = vmatpush1.msra.mxu0 0.0
    %461 = vmatprep.subr.mxu0 0.0
    %462 = vmatpush1.msra.mxu0 0.0
    %463 = vmatprep.subr.mxu0 0.0
    %464 = vmatpush1.msra.mxu0 0.0
    %465 = vmatprep.subr.mxu0 0.0
    %466 = vmatpush1.msra.mxu0 0.0
    %467 = vmatprep.subr.mxu0 0.0
    %468 = vmatpush1.msra.mxu0 0.0
    %469 = vmatprep.subr.mxu0 0.0
    %470 = vmatpush1.msra.mxu0 0.0
    %471 = vmatprep.subr.mxu0 0.0
    %472 = vmatpush1.msra.mxu0 0.0
    %473 = vmatprep.subr.mxu0 0.0
    %474 = vmatpush1.msra.mxu0 0.0
    %475 = vmatprep.subr.mxu0 0.0
    %476 = vmatpush1.msra.mxu0 0.0
    %477 = vmatprep.subr.mxu0 0.0
    %478 = vmatpush1.msra.mxu0 0.0
    %479 = vmatprep.subr.mxu0 0.0
    %480 = vmatpush1.msra.mxu0 0.0
    %481 = vmatprep.subr.mxu0 0.0
    %482 = vmatpush1.msra.mxu0 0.0
    %483 = vmatprep.subr.mxu0 0.0
    %484 = vmatpush1.msra.mxu0 0.0
    %485 = vmatprep.subr.mxu0 0.0
    %486 = vmatpush1.msra.mxu0 0.0
    %487 = vmatprep.subr.mxu0 0.0
    %488 = vmatpush1.msra.mxu0 0.0
    %489 = vmatprep.subr.mxu0 0.0
    %490 = vmatpush1.msra.mxu0 0.0
    %491 = vmatprep.subr.mxu0 0.0
    %492 = vmatpush1.msra.mxu0 0.0
    %493 = vmatprep.subr.mxu0 0.0
    %494 = vmatpush1.msra.mxu0 0.0
    %495 = vmatprep.subr.mxu0 0.0
    %496 = vmatpush1.msra.mxu0 0.0
    %497 = vmatprep.subr.mxu0 0.0
    %498 = vmatpush1.msra.mxu0 0.0
    %499 = vmatprep.subr.mxu0 0.0
    %500 = vmatpush1.msra.mxu0 0.0
    %501 = vmatprep.mubr.f32.mxu0 0.0
    %502 = vmatmul.mubr.f32.gmra.mrb[0].mxu0 %v435
    %v503 = vpop.f32.mrb[0].mxu0
    %v504 = vadd.f32 0.0, %v503
    %v505 = vpop.f32.mrb[0].mxu0
    %506 = vdwg.mxu0
    %v507 = vadd.f32 %v99, %v504
    %v508 = vxor.u32 %v507, 2147483648
    %v509 = vmul.f32 %v508, 1.442695
    %v510 = vpow.pop %v509
    %v511 = vadd.f32 %v510, 1.0
    %v512 = vrcp.pop %v511
    %v513 = vmul.f32 1.0, %v512
    %v514 = vmul.f32 %v513, 2.0
    %v515 = vsub.f32 %v514, 1.0
    %v516 = vmul.f32 %v513, %v425
    %518 = vrot.lane.b32.xlu0 %v515, 64
    %v519 = vpop.permute.xlu0 %518
    %v521 = vmul.f32 %v513, %v519
    %523 = vrot.lane.b32.xlu0 %v521, 32
    %v524 = vpop.permute.xlu0 %523
    %v526 = vadd.f32 %v516, %v524
    %v527 = vtanh.pop %v526
    %529 = vrot.lane.b32.xlu0 %v527, 64
    %v530 = vpop.permute.xlu0 %529
    %v532 = vmul.f32 %v513, %v530
    %534 = vrot.lane.b32.xlu0 %v532, 32
    %v535 = vpop.permute.xlu0 %534
    %v536 = vsel %vm126, %v535, 0
    %538 = vmatprep.subr.mxu0 0.0
    %539 = vmatpush1.msra.mxu0 %v58
    %540 = vmatprep.subr.mxu0 0.0
    %541 = vmatpush1.msra.mxu0 %v59
    %542 = vmatprep.subr.mxu0 0.0
    %543 = vmatpush1.msra.mxu0 %v60
    %544 = vmatprep.subr.mxu0 0.0
    %545 = vmatpush1.msra.mxu0 %v61
    %546 = vmatprep.subr.mxu0 0.0
    %547 = vmatpush1.msra.mxu0 0.0
    %548 = vmatprep.subr.mxu0 0.0
    %549 = vmatpush1.msra.mxu0 0.0
    %550 = vmatprep.subr.mxu0 0.0
    %551 = vmatpush1.msra.mxu0 0.0
    %552 = vmatprep.subr.mxu0 0.0
    %553 = vmatpush1.msra.mxu0 0.0
    %554 = vmatprep.subr.mxu0 0.0
    %555 = vmatpush1.msra.mxu0 0.0
    %556 = vmatprep.subr.mxu0 0.0
    %557 = vmatpush1.msra.mxu0 0.0
    %558 = vmatprep.subr.mxu0 0.0
    %559 = vmatpush1.msra.mxu0 0.0
    %560 = vmatprep.subr.mxu0 0.0
    %561 = vmatpush1.msra.mxu0 0.0
    %562 = vmatprep.subr.mxu0 0.0
    %563 = vmatpush1.msra.mxu0 0.0
    %564 = vmatprep.subr.mxu0 0.0
    %565 = vmatpush1.msra.mxu0 0.0
    %566 = vmatprep.subr.mxu0 0.0
    %567 = vmatpush1.msra.mxu0 0.0
    %568 = vmatprep.subr.mxu0 0.0
    %569 = vmatpush1.msra.mxu0 0.0
    %570 = vmatprep.subr.mxu0 0.0
    %571 = vmatpush1.msra.mxu0 0.0
    %572 = vmatprep.subr.mxu0 0.0
    %573 = vmatpush1.msra.mxu0 0.0
    %574 = vmatprep.subr.mxu0 0.0
    %575 = vmatpush1.msra.mxu0 0.0
    %576 = vmatprep.subr.mxu0 0.0
    %577 = vmatpush1.msra.mxu0 0.0
    %578 = vmatprep.subr.mxu0 0.0
    %579 = vmatpush1.msra.mxu0 0.0
    %580 = vmatprep.subr.mxu0 0.0
    %581 = vmatpush1.msra.mxu0 0.0
    %582 = vmatprep.subr.mxu0 0.0
    %583 = vmatpush1.msra.mxu0 0.0
    %584 = vmatprep.subr.mxu0 0.0
    %585 = vmatpush1.msra.mxu0 0.0
    %586 = vmatprep.subr.mxu0 0.0
    %587 = vmatpush1.msra.mxu0 0.0
    %588 = vmatprep.subr.mxu0 0.0
    %589 = vmatpush1.msra.mxu0 0.0
    %590 = vmatprep.subr.mxu0 0.0
    %591 = vmatpush1.msra.mxu0 0.0
    %592 = vmatprep.subr.mxu0 0.0
    %593 = vmatpush1.msra.mxu0 0.0
    %594 = vmatprep.subr.mxu0 0.0
    %595 = vmatpush1.msra.mxu0 0.0
    %596 = vmatprep.subr.mxu0 0.0
    %597 = vmatpush1.msra.mxu0 0.0
    %598 = vmatprep.subr.mxu0 0.0
    %599 = vmatpush1.msra.mxu0 0.0
    %600 = vmatprep.subr.mxu0 0.0
    %601 = vmatpush1.msra.mxu0 0.0
    %602 = vmatprep.mubr.f32.mxu0 0.0
    %603 = vmatmul.mubr.f32.gmra.mrb[0].mxu0 %v536
    %v604 = vpop.f32.mrb[0].mxu0
    %v605 = vadd.f32 0.0, %v604
    %v606 = vpop.f32.mrb[0].mxu0
    %607 = vdwg.mxu0
    %v608 = vadd.f32 %v105, %v605
    %v609 = vxor.u32 %v608, 2147483648
    %v610 = vmul.f32 %v609, 1.442695
    %v611 = vpow.pop %v610
    %v612 = vadd.f32 %v611, 1.0
    %v613 = vrcp.pop %v612
    %v614 = vmul.f32 1.0, %v613
    %v615 = vmul.f32 %v614, 2.0
    %v616 = vsub.f32 %v615, 1.0
    %v617 = vmul.f32 %v614, %v526
    %619 = vrot.lane.b32.xlu0 %v616, 64
    %v620 = vpop.permute.xlu0 %619
    %v622 = vmul.f32 %v614, %v620
    %624 = vrot.lane.b32.xlu0 %v622, 32
    %v625 = vpop.permute.xlu0 %624
    %v627 = vadd.f32 %v617, %v625
    %v628 = vtanh.pop %v627
    %630 = vrot.lane.b32.xlu0 %v628, 64
    %v631 = vpop.permute.xlu0 %630
    %v633 = vmul.f32 %v614, %v631
    %635 = vrot.lane.b32.xlu0 %v633, 32
    %v636 = vpop.permute.xlu0 %635
    %v637 = vsel %vm126, %v636, 0
    %639 = vmatprep.subr.mxu0 0.0
    %640 = vmatpush1.msra.mxu0 %v58
    %641 = vmatprep.subr.mxu0 0.0
    %642 = vmatpush1.msra.mxu0 %v59
    %643 = vmatprep.subr.mxu0 0.0
    %644 = vmatpush1.msra.mxu0 %v60
    %645 = vmatprep.subr.mxu0 0.0
    %646 = vmatpush1.msra.mxu0 %v61
    %647 = vmatprep.subr.mxu0 0.0
    %648 = vmatpush1.msra.mxu0 0.0
    %649 = vmatprep.subr.mxu0 0.0
    %650 = vmatpush1.msra.mxu0 0.0
    %651 = vmatprep.subr.mxu0 0.0
    %652 = vmatpush1.msra.mxu0 0.0
    %653 = vmatprep.subr.mxu0 0.0
    %654 = vmatpush1.msra.mxu0 0.0
    %655 = vmatprep.subr.mxu0 0.0
    %656 = vmatpush1.msra.mxu0 0.0
    %657 = vmatprep.subr.mxu0 0.0
    %658 = vmatpush1.msra.mxu0 0.0
    %659 = vmatprep.subr.mxu0 0.0
    %660 = vmatpush1.msra.mxu0 0.0
    %661 = vmatprep.subr.mxu0 0.0
    %662 = vmatpush1.msra.mxu0 0.0
    %663 = vmatprep.subr.mxu0 0.0
    %664 = vmatpush1.msra.mxu0 0.0
    %665 = vmatprep.subr.mxu0 0.0
    %666 = vmatpush1.msra.mxu0 0.0
    %667 = vmatprep.subr.mxu0 0.0
    %668 = vmatpush1.msra.mxu0 0.0
    %669 = vmatprep.subr.mxu0 0.0
    %670 = vmatpush1.msra.mxu0 0.0
    %671 = vmatprep.subr.mxu0 0.0
    %672 = vmatpush1.msra.mxu0 0.0
    %673 = vmatprep.subr.mxu0 0.0
    %674 = vmatpush1.msra.mxu0 0.0
    %675 = vmatprep.subr.mxu0 0.0
    %676 = vmatpush1.msra.mxu0 0.0
    %677 = vmatprep.subr.mxu0 0.0
    %678 = vmatpush1.msra.mxu0 0.0
    %679 = vmatprep.subr.mxu0 0.0
    %680 = vmatpush1.msra.mxu0 0.0
    %681 = vmatprep.subr.mxu0 0.0
    %682 = vmatpush1.msra.mxu0 0.0
    %683 = vmatprep.subr.mxu0 0.0
    %684 = vmatpush1.msra.mxu0 0.0
    %685 = vmatprep.subr.mxu0 0.0
    %686 = vmatpush1.msra.mxu0 0.0
    %687 = vmatprep.subr.mxu0 0.0
    %688 = vmatpush1.msra.mxu0 0.0
    %689 = vmatprep.subr.mxu0 0.0
    %690 = vmatpush1.msra.mxu0 0.0
    %691 = vmatprep.subr.mxu0 0.0
    %692 = vmatpush1.msra.mxu0 0.0
    %693 = vmatprep.subr.mxu0 0.0
    %694 = vmatpush1.msra.mxu0 0.0
    %695 = vmatprep.subr.mxu0 0.0
    %696 = vmatpush1.msra.mxu0 0.0
    %697 = vmatprep.subr.mxu0 0.0
    %698 = vmatpush1.msra.mxu0 0.0
    %699 = vmatprep.subr.mxu0 0.0
    %700 = vmatpush1.msra.mxu0 0.0
    %701 = vmatprep.subr.mxu0 0.0
    %702 = vmatpush1.msra.mxu0 0.0
    %703 = vmatprep.mubr.f32.mxu0 0.0
    %704 = vmatmul.mubr.f32.gmra.mrb[0].mxu0 %v637
    %v705 = vpop.f32.mrb[0].mxu0
    %v706 = vadd.f32 0.0, %v705
    %v707 = vpop.f32.mrb[0].mxu0
    %708 = vdwg.mxu0
    %v709 = vadd.f32 %v111, %v706
    %v710 = vxor.u32 %v709, 2147483648
    %v711 = vmul.f32 %v710, 1.442695
    %v712 = vpow.pop %v711
    %v713 = vadd.f32 %v712, 1.0
    %v714 = vrcp.pop %v713
    %v715 = vmul.f32 1.0, %v714
    %v716 = vmul.f32 %v715, 2.0
    %v717 = vsub.f32 %v716, 1.0
    %v718 = vmul.f32 %v715, %v627
    %720 = vrot.lane.b32.xlu0 %v717, 64
    %v721 = vpop.permute.xlu0 %720
    %v723 = vmul.f32 %v715, %v721
    %725 = vrot.lane.b32.xlu0 %v723, 32
    %v726 = vpop.permute.xlu0 %725
    %v728 = vadd.f32 %v718, %v726
    %v729 = vtanh.pop %v728
    %731 = vrot.lane.b32.xlu0 %v729, 64
    %v732 = vpop.permute.xlu0 %731
    %v734 = vmul.f32 %v715, %v732
    %736 = vrot.lane.b32.xlu0 %v734, 32
    %v737 = vpop.permute.xlu0 %736
    %v738 = vsel %vm126, %v737, 0
    %740 = vmatprep.subr.mxu0 0.0
    %741 = vmatpush1.msra.mxu0 %v58
    %742 = vmatprep.subr.mxu0 0.0
    %743 = vmatpush1.msra.mxu0 %v59
    %744 = vmatprep.subr.mxu0 0.0
    %745 = vmatpush1.msra.mxu0 %v60
    %746 = vmatprep.subr.mxu0 0.0
    %747 = vmatpush1.msra.mxu0 %v61
    %748 = vmatprep.subr.mxu0 0.0
    %749 = vmatpush1.msra.mxu0 0.0
    %750 = vmatprep.subr.mxu0 0.0
    %751 = vmatpush1.msra.mxu0 0.0
    %752 = vmatprep.subr.mxu0 0.0
    %753 = vmatpush1.msra.mxu0 0.0
    %754 = vmatprep.subr.mxu0 0.0
    %755 = vmatpush1.msra.mxu0 0.0
    %756 = vmatprep.subr.mxu0 0.0
    %757 = vmatpush1.msra.mxu0 0.0
    %758 = vmatprep.subr.mxu0 0.0
    %759 = vmatpush1.msra.mxu0 0.0
    %760 = vmatprep.subr.mxu0 0.0
    %761 = vmatpush1.msra.mxu0 0.0
    %762 = vmatprep.subr.mxu0 0.0
    %763 = vmatpush1.msra.mxu0 0.0
    %764 = vmatprep.subr.mxu0 0.0
    %765 = vmatpush1.msra.mxu0 0.0
    %766 = vmatprep.subr.mxu0 0.0
    %767 = vmatpush1.msra.mxu0 0.0
    %768 = vmatprep.subr.mxu0 0.0
    %769 = vmatpush1.msra.mxu0 0.0
    %770 = vmatprep.subr.mxu0 0.0
    %771 = vmatpush1.msra.mxu0 0.0
    %772 = vmatprep.subr.mxu0 0.0
    %773 = vmatpush1.msra.mxu0 0.0
    %774 = vmatprep.subr.mxu0 0.0
    %775 = vmatpush1.msra.mxu0 0.0
    %776 = vmatprep.subr.mxu0 0.0
    %777 = vmatpush1.msra.mxu0 0.0
    %778 = vmatprep.subr.mxu0 0.0
    %779 = vmatpush1.msra.mxu0 0.0
    %780 = vmatprep.subr.mxu0 0.0
    %781 = vmatpush1.msra.mxu0 0.0
    %782 = vmatprep.subr.mxu0 0.0
    %783 = vmatpush1.msra.mxu0 0.0
    %784 = vmatprep.subr.mxu0 0.0
    %785 = vmatpush1.msra.mxu0 0.0
    %786 = vmatprep.subr.mxu0 0.0
    %787 = vmatpush1.msra.mxu0 0.0
    %788 = vmatprep.subr.mxu0 0.0
    %789 = vmatpush1.msra.mxu0 0.0
    %790 = vmatprep.subr.mxu0 0.0
    %791 = vmatpush1.msra.mxu0 0.0
    %792 = vmatprep.subr.mxu0 0.0
    %793 = vmatpush1.msra.mxu0 0.0
    %794 = vmatprep.subr.mxu0 0.0
    %795 = vmatpush1.msra.mxu0 0.0
    %796 = vmatprep.subr.mxu0 0.0
    %797 = vmatpush1.msra.mxu0 0.0
    %798 = vmatprep.subr.mxu0 0.0
    %799 = vmatpush1.msra.mxu0 0.0
    %800 = vmatprep.subr.mxu0 0.0
    %801 = vmatpush1.msra.mxu0 0.0
    %802 = vmatprep.subr.mxu0 0.0
    %803 = vmatpush1.msra.mxu0 0.0
    %804 = vmatprep.mubr.f32.mxu0 0.0
    %805 = vmatmul.mubr.f32.gmra.mrb[0].mxu0 %v738
    %v806 = vpop.f32.mrb[0].mxu0
    %v807 = vadd.f32 0.0, %v806
    %v808 = vpop.f32.mrb[0].mxu0
    %809 = vdwg.mxu0
    %v810 = vadd.f32 %v117, %v807
    %v811 = vxor.u32 %v810, 2147483648
    %v812 = vmul.f32 %v811, 1.442695
    %v813 = vpow.pop %v812
    %v814 = vadd.f32 %v813, 1.0
    %v815 = vrcp.pop %v814
    %v816 = vmul.f32 1.0, %v815
    %v817 = vmul.f32 %v816, 2.0
    %v818 = vsub.f32 %v817, 1.0
    %v819 = vmul.f32 %v816, %v728
    %821 = vrot.lane.b32.xlu0 %v818, 64
    %v822 = vpop.permute.xlu0 %821
    %v824 = vmul.f32 %v816, %v822
    %826 = vrot.lane.b32.xlu0 %v824, 32
    %v827 = vpop.permute.xlu0 %826
    %v829 = vadd.f32 %v819, %v827
    %v830 = vtanh.pop %v829
    %832 = vrot.lane.b32.xlu0 %v830, 64
    %v833 = vpop.permute.xlu0 %832
    %v835 = vmul.f32 %v816, %v833
    %837 = vrot.lane.b32.xlu0 %v835, 32
    %v838 = vpop.permute.xlu0 %837
    %v839 = vsel %vm126, %v838, 0
    %841 = vmatprep.subr.mxu0 0.0
    %842 = vmatpush1.msra.mxu0 %v58
    %843 = vmatprep.subr.mxu0 0.0
    %844 = vmatpush1.msra.mxu0 %v59
    %845 = vmatprep.subr.mxu0 0.0
    %846 = vmatpush1.msra.mxu0 %v60
    %847 = vmatprep.subr.mxu0 0.0
    %848 = vmatpush1.msra.mxu0 %v61
    %849 = vmatprep.subr.mxu0 0.0
    %850 = vmatpush1.msra.mxu0 0.0
    %851 = vmatprep.subr.mxu0 0.0
    %852 = vmatpush1.msra.mxu0 0.0
    %853 = vmatprep.subr.mxu0 0.0
    %854 = vmatpush1.msra.mxu0 0.0
    %855 = vmatprep.subr.mxu0 0.0
    %856 = vmatpush1.msra.mxu0 0.0
    %857 = vmatprep.subr.mxu0 0.0
    %858 = vmatpush1.msra.mxu0 0.0
    %859 = vmatprep.subr.mxu0 0.0
    %860 = vmatpush1.msra.mxu0 0.0
    %861 = vmatprep.subr.mxu0 0.0
    %862 = vmatpush1.msra.mxu0 0.0
    %863 = vmatprep.subr.mxu0 0.0
    %864 = vmatpush1.msra.mxu0 0.0
    %865 = vmatprep.subr.mxu0 0.0
    %866 = vmatpush1.msra.mxu0 0.0
    %867 = vmatprep.subr.mxu0 0.0
    %868 = vmatpush1.msra.mxu0 0.0
    %869 = vmatprep.subr.mxu0 0.0
    %870 = vmatpush1.msra.mxu0 0.0
    %871 = vmatprep.subr.mxu0 0.0
    %872 = vmatpush1.msra.mxu0 0.0
    %873 = vmatprep.subr.mxu0 0.0
    %874 = vmatpush1.msra.mxu0 0.0
    %875 = vmatprep.subr.mxu0 0.0
    %876 = vmatpush1.msra.mxu0 0.0
    %877 = vmatprep.subr.mxu0 0.0
    %878 = vmatpush1.msra.mxu0 0.0
    %879 = vmatprep.subr.mxu0 0.0
    %880 = vmatpush1.msra.mxu0 0.0
    %881 = vmatprep.subr.mxu0 0.0
    %882 = vmatpush1.msra.mxu0 0.0
    %883 = vmatprep.subr.mxu0 0.0
    %884 = vmatpush1.msra.mxu0 0.0
    %885 = vmatprep.subr.mxu0 0.0
    %886 = vmatpush1.msra.mxu0 0.0
    %887 = vmatprep.subr.mxu0 0.0
    %888 = vmatpush1.msra.mxu0 0.0
    %889 = vmatprep.subr.mxu0 0.0
    %890 = vmatpush1.msra.mxu0 0.0
    %891 = vmatprep.subr.mxu0 0.0
    %892 = vmatpush1.msra.mxu0 0.0
    %893 = vmatprep.subr.mxu0 0.0
    %894 = vmatpush1.msra.mxu0 0.0
    %895 = vmatprep.subr.mxu0 0.0
    %896 = vmatpush1.msra.mxu0 0.0
    %897 = vmatprep.subr.mxu0 0.0
    %898 = vmatpush1.msra.mxu0 0.0
    %899 = vmatprep.subr.mxu0 0.0
    %900 = vmatpush1.msra.mxu0 0.0
    %901 = vmatprep.subr.mxu0 0.0
    %902 = vmatpush1.msra.mxu0 0.0
    %903 = vmatprep.subr.mxu0 0.0
    %904 = vmatpush1.msra.mxu0 0.0
    %905 = vmatprep.mubr.f32.mxu0 0.0
    %906 = vmatmul.mubr.f32.gmra.mrb[0].mxu0 %v839
    %v907 = vpop.f32.mrb[0].mxu0
    %v908 = vadd.f32 0.0, %v907
    %v909 = vpop.f32.mrb[0].mxu0
    %910 = vdwg.mxu0
    %v911 = vadd.f32 %v123, %v908
    %v912 = vxor.u32 %v911, 2147483648
    %v913 = vmul.f32 %v912, 1.442695
    %v914 = vpow.pop %v913
    %v915 = vadd.f32 %v914, 1.0
    %v916 = vrcp.pop %v915
    %v917 = vmul.f32 1.0, %v916
    %v918 = vmul.f32 %v917, 2.0
    %v919 = vsub.f32 %v918, 1.0
    %v920 = vmul.f32 %v917, %v829
    %922 = vrot.lane.b32.xlu0 %v919, 64
    %v923 = vpop.permute.xlu0 %922
    %v925 = vmul.f32 %v917, %v923
    %927 = vrot.lane.b32.xlu0 %v925, 32
    %v928 = vpop.permute.xlu0 %927
    %v930 = vadd.f32 %v920, %v928
    %v931 = vtanh.pop %v930
    %933 = vrot.lane.b32.xlu0 %v931, 64
    %v934 = vpop.permute.xlu0 %933
    %v936 = vmul.f32 %v917, %v934
    %v937 = vlaneseq
    %v938 = vshrl.u32 %v937, 7
    %v939 = vsub.s32 0, %v938
    %v940 = vrot.slane %v57, %v939
    %942 = vrot.lane.b32.xlu0 %v936, 32
    %v943 = vpop.permute.xlu0 %942
    %v944 = vsel %vm126, %v943, 0
    %946 = vmatprep.subr.mxu0 0.0
    %947 = vmatpush1.msra.mxu0 %v62
    %948 = vmatprep.subr.mxu0 0.0
    %949 = vmatpush1.msra.mxu0 %v63
    %950 = vmatprep.subr.mxu0 0.0
    %951 = vmatpush1.msra.mxu0 %v64
    %952 = vmatprep.subr.mxu0 0.0
    %953 = vmatpush1.msra.mxu0 %v65
    %954 = vmatprep.subr.mxu0 0.0
    %955 = vmatpush1.msra.mxu0 0.0
    %956 = vmatprep.subr.mxu0 0.0
    %957 = vmatpush1.msra.mxu0 0.0
    %958 = vmatprep.subr.mxu0 0.0
    %959 = vmatpush1.msra.mxu0 0.0
    %960 = vmatprep.subr.mxu0 0.0
    %961 = vmatpush1.msra.mxu0 0.0
    %962 = vmatprep.subr.mxu0 0.0
    %963 = vmatpush1.msra.mxu0 0.0
    %964 = vmatprep.subr.mxu0 0.0
    %965 = vmatpush1.msra.mxu0 0.0
    %966 = vmatprep.subr.mxu0 0.0
    %967 = vmatpush1.msra.mxu0 0.0
    %968 = vmatprep.subr.mxu0 0.0
    %969 = vmatpush1.msra.mxu0 0.0
    %970 = vmatprep.subr.mxu0 0.0
    %971 = vmatpush1.msra.mxu0 0.0
    %972 = vmatprep.subr.mxu0 0.0
    %973 = vmatpush1.msra.mxu0 0.0
    %974 = vmatprep.subr.mxu0 0.0
    %975 = vmatpush1.msra.mxu0 0.0
    %976 = vmatprep.subr.mxu0 0.0
    %977 = vmatpush1.msra.mxu0 0.0
    %978 = vmatprep.subr.mxu0 0.0
    %979 = vmatpush1.msra.mxu0 0.0
    %980 = vmatprep.subr.mxu0 0.0
    %981 = vmatpush1.msra.mxu0 0.0
    %982 = vmatprep.subr.mxu0 0.0
    %983 = vmatpush1.msra.mxu0 0.0
    %984 = vmatprep.subr.mxu0 0.0
    %985 = vmatpush1.msra.mxu0 0.0
    %986 = vmatprep.subr.mxu0 0.0
    %987 = vmatpush1.msra.mxu0 0.0
    %988 = vmatprep.subr.mxu0 0.0
    %989 = vmatpush1.msra.mxu0 0.0
    %990 = vmatprep.subr.mxu0 0.0
    %991 = vmatpush1.msra.mxu0 0.0
    %992 = vmatprep.subr.mxu0 0.0
    %993 = vmatpush1.msra.mxu0 0.0
    %994 = vmatprep.subr.mxu0 0.0
    %995 = vmatpush1.msra.mxu0 0.0
    %996 = vmatprep.subr.mxu0 0.0
    %997 = vmatpush1.msra.mxu0 0.0
    %998 = vmatprep.subr.mxu0 0.0
    %999 = vmatpush1.msra.mxu0 0.0
    %1000 = vmatprep.subr.mxu0 0.0
    %1001 = vmatpush1.msra.mxu0 0.0
    %1002 = vmatprep.subr.mxu0 0.0
    %1003 = vmatpush1.msra.mxu0 0.0
    %1004 = vmatprep.subr.mxu0 0.0
    %1005 = vmatpush1.msra.mxu0 0.0
    %1006 = vmatprep.subr.mxu0 0.0
    %1007 = vmatpush1.msra.mxu0 0.0
    %1008 = vmatprep.subr.mxu0 0.0
    %1009 = vmatpush1.msra.mxu0 0.0
    %1010 = vmatprep.mubr.f32.mxu0 0.0
    %1011 = vmatmul.mubr.f32.gmra.mrb[0].mxu0 %v944
    %v1012 = vpop.f32.mrb[0].mxu0
    %v1013 = vadd.f32 %v940, %v1012
    %v1014 = vpop.f32.mrb[0].mxu0
    %1015 = vdwg.mxu0
    %1016 = vst [vmem:[#allocation8] sm:$0x3] %v1013
    // Predicated region
    $region30: #{tpu_custom_call.1} parent=1 // pred_check
      _
    $region31: #{tpu_custom_call.1} parent=1 // pred_check_branch
      %1018 = sbr.rel (0) target = $region33
    $region32: #{tpu_custom_call.1} parent=1 // pred_region
      %s1020 = ssub.s32 32, 32
      %1021 = vsyncadd [#allocation4], %s1020
      %s1023 = sshll.u32 [#allocation8], 4
      %s1024 = int_to_ptr.vmem [resolvable:$true] %s1023
      %1026 = dma.vmem_to_hbm [thread:$0]  %s1024, 32, %s4, [#allocation4]
    $region33: #{tpu_custom_call.1} parent=1 // pred_fallthru
      _
    // Predicated region
    $region34: #{tpu_custom_call.1} parent=1 // pred_check
      _
    $region35: #{tpu_custom_call.1} parent=1 // pred_check_branch
      %1028 = sbr.rel (0) target = $region37
    $region36: #{tpu_custom_call.1} parent=1 // pred_region
      %1029 = dma.done [#allocation4], 32
    $region37: #{tpu_custom_call.1} parent=1 // pred_fallthru
      _
    %1030 = vsyncpa [#allocation3], 1
    %1031 = vsyncpa [#allocation6], 1
    %1032 = vsyncpa [#allocation4], 1

</llo_original>
